<compile_context>
chip_gen: v6e
topology: v6e:2x2x1
jax: 0.10.0
libtpu: 0.0.40
codegen_flags: <defaults>
</compile_context>

<pallas_src>
import functools

import numpy as np
import jax
import jax.numpy as jnp
from jax import lax
from jax.experimental import pallas as pl
from jax.experimental.pallas import tpu as pltpu


def _round_up(x: int, m: int) -> int:
    return ((x + m - 1) // m) * m


# ----------------------------------------------------------------------------
# Precomputed per-position vectors in the ORIGINAL flat layout.
# For degree l, the flat block [l^2*C, (l+1)^2*C) is channel-major:
#   position = l^2*C + c*(2l+1) + m   <->   (sphere index s = l^2 + m, channel c)
# ----------------------------------------------------------------------------
def _build_params(lmax, C, affine_weight, affine_bias, *, affine, centering,
                  normalization, std_balance_degrees):
    S = (lmax + 1) ** 2
    F = S * C

    # Per-position weight so that  fnorm[n] = sum_f x[n,f]^2 * norm_w[f]
    # reproduces (mean over channels of) the chosen normalization.
    norm_w = np.zeros((F,), np.float32)
    for l in range(lmax + 1):
        start = l * l * C
        length = (2 * l + 1) * C
        if normalization == 'norm':
            w = 1.0 / C
        elif std_balance_degrees:
            w = 1.0 / ((2 * l + 1) * (lmax + 1) * C)
        else:
            w = 1.0 / (S * C)
        norm_w[start:start + length] = w
    norm_w = jnp.asarray(norm_w)

    if affine:
        # affine_weight[l, c] repeated over the (2l+1) m-components of channel c
        blocks = [jnp.repeat(affine_weight[l].astype(jnp.float32), 2 * l + 1)
                  for l in range(lmax + 1)]
        aff_w = jnp.concatenate(blocks, axis=0)
    else:
        aff_w = jnp.ones((F,), jnp.float32)

    bias_vec = jnp.zeros((F,), jnp.float32)
    if affine and centering:
        bias_vec = bias_vec.at[:C].set(affine_bias.astype(jnp.float32))

    # l=0 centering mask (first C flat positions) -- precomputed so the kernel
    # body does no broadcasted_iota / compare / cast per grid step.
    l0_mask = np.zeros((F,), np.float32)
    l0_mask[:C] = 1.0
    l0_mask = jnp.asarray(l0_mask)

    return jnp.stack([norm_w, aff_w, bias_vec, l0_mask], axis=0)   # (4, F) f32


# ----------------------------------------------------------------------------
# Pallas kernel: per-node RMS layer-norm on a (tile_n, F) slab.
# ----------------------------------------------------------------------------
def _rms_ln_kernel(x_ref, p_ref, o_ref, *, C, eps, affine, centering):
    x = x_ref[...].astype(jnp.float32)                        # (tn, F)
    norm_w = p_ref[0:1, :]                                    # (1, F)

    if centering:
        l0_mask = p_ref[3:4, :]                               # (1, F)
        l0_mean = jnp.sum(x * l0_mask, axis=1, keepdims=True) * (1.0 / C)
        feat = x - l0_mean * l0_mask
    else:
        feat = x

    fnorm = jnp.sum(feat * feat * norm_w, axis=1, keepdims=True)   # (tn, 1)
    inv = lax.rsqrt(fnorm + eps)                                   # (tn, 1)

    out = feat * inv
    if affine:
        out = out * p_ref[1:2, :]
        if centering:
            out = out + p_ref[2:3, :]          # bias is zero outside the l=0 block

    o_ref[...] = out.astype(o_ref.dtype)


def equiformer_rms_layernorm(node_input, affine_weight, affine_bias, *, lmax,
                             num_channels, eps=1e-12, affine=True,
                             normalization='component', centering=True,
                             std_balance_degrees=True, tile_n=2048):
    assert normalization in ('norm', 'component')
    if normalization == 'norm':
        assert not std_balance_degrees

    N, F_in = node_input.shape
    S = (lmax + 1) ** 2
    C = num_channels
    F = S * C
    assert F_in == F

    params = _build_params(lmax, C, affine_weight, affine_bias,
                           affine=affine, centering=centering,
                           normalization=normalization,
                           std_balance_degrees=std_balance_degrees)

    itemsize = node_input.dtype.itemsize
    granule = max(8, 32 // itemsize)           # sublane packing: 8 f32, 16 bf16

    # VMEM budget per row: in/out double-buffered at lane-padded width
    # + f32 intermediates.  Cap the working set at ~44 MiB (v7x-safe).
    lane_pad = _round_up(F, 128)
    per_row = 4 * lane_pad * itemsize + 4 * lane_pad * 4
    vmem_cap = 44 * 1024 * 1024
    max_rows_by_vmem = max(granule, (vmem_cap // per_row) // granule * granule)

    # Big memory-bound tiles, but >= 2 grid steps whenever N allows so both
    # v7x TensorCores get work; no wrapper-side pad — ragged tail handled by
    # Pallas masked stores (safe: computation is strictly per-row).
    tile_n = min(int(tile_n), max_rows_by_vmem)
    tile_n = min(tile_n, _round_up(pl.cdiv(N, 2), granule))
    tile_n = max(granule, _round_up(tile_n, granule))

    grid = (pl.cdiv(N, tile_n),)
    vmem_limit = int(min(max(per_row * tile_n + (4 << 20), 16 << 20), 48 << 20))

    kernel = functools.partial(_rms_ln_kernel, C=C, eps=eps,
                               affine=affine, centering=centering)

    return pl.pallas_call(
        kernel,
        out_shape=jax.ShapeDtypeStruct((N, F), node_input.dtype),
        grid_spec=pltpu.PrefetchScalarGridSpec(
            num_scalar_prefetch=0,
            grid=grid,
            in_specs=[
                pl.BlockSpec((tile_n, F), lambda i: (i, 0)),
                pl.BlockSpec((4, F), lambda i: (0, 0)),
            ],
            out_specs=pl.BlockSpec((tile_n, F), lambda i: (i, 0)),
        ),
        compiler_params=pltpu.CompilerParams(
            dimension_semantics=("parallel",),
            vmem_limit_bytes=vmem_limit),
    )(node_input, params)


# ----------------------------------------------------------------------------
# Pure-JAX reference mirroring the PyTorch forward (with the irreps reshapes)
# ----------------------------------------------------------------------------
def _reshape_irreps(x, lmax, C):
    outs = []
    for l in range(lmax + 1):
        f = x[:, l ** 2 * C:(l + 1) ** 2 * C]
        f = f.reshape(-1, C, 2 * l + 1).transpose(0, 2, 1)
        outs.append(f)
    return jnp.concatenate(outs, axis=1)


def _recover_irreps(x, lmax, C):
    outs = []
    for l in range(lmax + 1):
        f = x[:, l ** 2:(l + 1) ** 2, :]
        f = f.transpose(0, 2, 1).reshape(x.shape[0], -1)
        outs.append(f)
    return jnp.concatenate(outs, axis=1)


def reference_forward(node_input, affine_weight, affine_bias, *, lmax,
                      num_channels, eps=1e-12):
    S = (lmax + 1) ** 2
    C = num_channels
    feat = _reshape_irreps(node_input, lmax, C)
    l0 = feat[:, 0:1, :]
    l0 = l0 - jnp.mean(l0, axis=2, keepdims=True)
    feat = jnp.concatenate([l0, feat[:, 1:, :]], axis=1)
    bal = np.zeros((S, 1), np.float32)
    for l in range(lmax + 1):
        bal[l ** 2:(l + 1) ** 2, 0] = 1.0 / (2 * l + 1)
    bal = jnp.asarray(bal) / (lmax + 1)
    fnorm = jnp.einsum('nic,ia->nac', feat ** 2, bal)          # (N,1,C)
    fnorm = jnp.mean(fnorm, axis=2, keepdims=True)
    fnorm = (fnorm + eps) ** -0.5
    expand = np.zeros((S,), np.int32)
    for l in range(lmax + 1):
        expand[l ** 2:(l + 1) ** 2] = l
    w = jnp.take(affine_weight, jnp.asarray(expand), axis=0)
    fnorm = fnorm * w[None, :, :]
    out = feat * fnorm
    out = out.at[:, 0:1, :].add(affine_bias.reshape(1, 1, C))
    return _recover_irreps(out, lmax, C)


if __name__ == "__main__":
    lmax = 2
    C = 16
    S = (lmax + 1) ** 2                      # 9
    feature_dim = S * C                      # 144

    key = jax.random.PRNGKey(0)
    k1, k2, k3 = jax.random.split(key, 3)
    affine_weight = 1.0 + 0.1 * jax.random.normal(k2, (lmax + 1, C), jnp.float32)
    affine_bias = 0.1 * jax.random.normal(k3, (C,), jnp.float32)

    # Case 1: small N, not a multiple of 8 -> ragged last block, 2-step grid.
    N1 = 12
    x1 = jax.random.normal(k1, (N1, feature_dim), dtype=jnp.float32)
    out1 = equiformer_rms_layernorm(
        x1, affine_weight, affine_bias,
        lmax=lmax, num_channels=C, eps=1e-12,
        affine=True, normalization='component',
        centering=True, std_balance_degrees=True)
    out1 = jax.block_until_ready(out1)
    ref1 = reference_forward(x1, affine_weight, affine_bias,
                             lmax=lmax, num_channels=C, eps=1e-12)
    assert out1.shape == (N1, feature_dim)
    assert jnp.allclose(out1, ref1, rtol=1e-5, atol=1e-5), "mismatch vs reference (N=12)"

    # Case 2: medium N -> tile clamp to ~N/2, balanced 2-step grid + ragged tail.
    N2 = 300
    x2 = jax.random.normal(jax.random.PRNGKey(7), (N2, feature_dim), jnp.float32)
    out2 = equiformer_rms_layernorm(
        x2, affine_weight, affine_bias,
        lmax=lmax, num_channels=C, eps=1e-12,
        affine=True, normalization='component',
        centering=True, std_balance_degrees=True)
    out2 = jax.block_until_ready(out2)
    ref2 = reference_forward(x2, affine_weight, affine_bias,
                             lmax=lmax, num_channels=C, eps=1e-12)
    assert out2.shape == (N2, feature_dim)
    assert jnp.allclose(out2, ref2, rtol=1e-5, atol=1e-5), "mismatch vs reference (N=300)"

    print("KERNEL_OK")
</pallas_src>

<mosaic_0001>
module attributes {stable_mosaic.version = 11 : i64} {
  func.func @_rms_ln_kernel(%arg0: i32, %arg1: memref<8x144xf32, #tpu.memory_space<vmem>>, %arg2: memref<4x144xf32, #tpu.memory_space<vmem>>, %arg3: memref<8x144xf32, #tpu.memory_space<vmem>>) attributes {dimension_semantics = [#tpu.dimension_semantics<parallel>], iteration_bounds = array<i64: 2>, scalar_prefetch = 0 : i64, scratch_operands = 0 : i64, tpu.core_type = #tpu.core_type<tc>, window_params = [{transform_indices = @transform_0, window_bounds = array<i64: 8, 144>}, {pipeline_mode = #tpu.pipeline_mode<synchronous>, transform_indices = @transform_1, window_bounds = array<i64: 4, 144>}, {transform_indices = @transform_2, window_bounds = array<i64: 8, 144>}]} {
    %c0 = arith.constant 0 : index
    %c0_0 = arith.constant 0 : index
    %0 = vector.load %arg1[%c0, %c0_0] : memref<8x144xf32, #tpu.memory_space<vmem>>, vector<8x144xf32>
    %c0_1 = arith.constant 0 : index
    %c0_2 = arith.constant 0 : index
    %1 = vector.load %arg2[%c0_1, %c0_2] : memref<4x144xf32, #tpu.memory_space<vmem>>, vector<1x144xf32>
    %c3 = arith.constant 3 : index
    %c0_3 = arith.constant 0 : index
    %2 = vector.load %arg2[%c3, %c0_3] : memref<4x144xf32, #tpu.memory_space<vmem>>, vector<1x144xf32>
    %3 = vector.broadcast %2 : vector<1x144xf32> to vector<8x144xf32>
    %4 = arith.mulf %0, %3 : vector<8x144xf32>
    %cst = arith.constant dense<0.000000e+00> : vector<8xf32>
    %5 = vector.multi_reduction <add>, %4, %cst [1] : vector<8x144xf32> to vector<8xf32>
    %6 = vector.shape_cast %5 : vector<8xf32> to vector<8x1xf32>
    %cst_4 = arith.constant 6.250000e-02 : f32
    %7 = vector.broadcast %cst_4 : f32 to vector<8x1xf32>
    %8 = arith.mulf %6, %7 : vector<8x1xf32>
    %9 = vector.broadcast %8 : vector<8x1xf32> to vector<8x144xf32>
    %10 = vector.broadcast %2 : vector<1x144xf32> to vector<8x144xf32>
    %11 = arith.mulf %9, %10 : vector<8x144xf32>
    %12 = arith.subf %0, %11 : vector<8x144xf32>
    %13 = arith.mulf %12, %12 : vector<8x144xf32>
    %14 = vector.broadcast %1 : vector<1x144xf32> to vector<8x144xf32>
    %15 = arith.mulf %13, %14 : vector<8x144xf32>
    %cst_5 = arith.constant dense<0.000000e+00> : vector<8xf32>
    %16 = vector.multi_reduction <add>, %15, %cst_5 [1] : vector<8x144xf32> to vector<8xf32>
    %17 = vector.shape_cast %16 : vector<8xf32> to vector<8x1xf32>
    %cst_6 = arith.constant 9.99999996E-13 : f32
    %18 = vector.broadcast %cst_6 : f32 to vector<8x1xf32>
    %19 = arith.addf %17, %18 : vector<8x1xf32>
    %20 = math.rsqrt %19 : vector<8x1xf32>
    %21 = vector.broadcast %20 : vector<8x1xf32> to vector<8x144xf32>
    %22 = arith.mulf %12, %21 : vector<8x144xf32>
    %c1 = arith.constant 1 : index
    %c0_7 = arith.constant 0 : index
    %23 = vector.load %arg2[%c1, %c0_7] : memref<4x144xf32, #tpu.memory_space<vmem>>, vector<1x144xf32>
    %24 = vector.broadcast %23 : vector<1x144xf32> to vector<8x144xf32>
    %25 = arith.mulf %22, %24 : vector<8x144xf32>
    %c2 = arith.constant 2 : index
    %c0_8 = arith.constant 0 : index
    %26 = vector.load %arg2[%c2, %c0_8] : memref<4x144xf32, #tpu.memory_space<vmem>>, vector<1x144xf32>
    %27 = vector.broadcast %26 : vector<1x144xf32> to vector<8x144xf32>
    %28 = arith.addf %25, %27 : vector<8x144xf32>
    %c0_9 = arith.constant 0 : index
    %c0_10 = arith.constant 0 : index
    %29 = vector.load %arg3[%c0_9, %c0_10] : memref<8x144xf32, #tpu.memory_space<vmem>>, vector<8x144xf32>
    tpu.vector_store %arg3[%c0_9, %c0_10], %28 {strides = array<i32>} : memref<8x144xf32, #tpu.memory_space<vmem>>, vector<8x144xf32>,
    return
  }
  func.func @transform_0(%arg0: i32) -> (i32, i32) {
    %c0_i32 = arith.constant 0 : i32
    %c0_i32_0 = arith.constant 0 : i32
    return %arg0, %c0_i32 : i32, i32
  }
  func.func @transform_1(%arg0: i32) -> (i32, i32) {
    %c0_i32 = arith.constant 0 : i32
    %c0_i32_0 = arith.constant 0 : i32
    %c0_i32_1 = arith.constant 0 : i32
    return %c0_i32, %c0_i32_0 : i32, i32
  }
  func.func @transform_2(%arg0: i32) -> (i32, i32) {
    %c0_i32 = arith.constant 0 : i32
    %c0_i32_0 = arith.constant 0 : i32
    return %arg0, %c0_i32 : i32, i32
  }
}

</mosaic_0001>

<llo_original>
// kernel: tpu_custom_call.1
$region0: #{tpu_custom_call.1}
  #allocation0 [shape = 'u32[]', space=smem, size = 0x4, offset = 0x4, fixed_abs, tag = 'smem constant byte address 0x4 - core index']
  #allocation1 [shape = 'u32[144,128]{1,0:T(1,128)}', space=vmem, size = 0x12000, scoped, tag = 'internal scratch']
  %s0 = inlined_call_operand.hbm [shape: f32[12,144], index: 0, kind: input, shape index: {}]
  %s1 = inlined_call_operand.hbm [shape: f32[4,144], index: 1, kind: input, shape index: {}]
  %s2 = inlined_call_operand.hbm [shape: f32[12,144], index: 2, kind: output, shape index: {}]
  %s3 = sld [smem:[#allocation0]]
  $region49: #{tpu_custom_call.1} parent=0
    _
  %s5 = ssub.s32 1, %s3
  %s6 = scalar_select 0, %s5, %s3
  $region1: #{tpu_custom_call.1} parent=0
    #allocation2 [shape = 'u8[16384]{0}', space=vmem, size = 0x4000, scoped, tag = 'input window, operand 0']
    #allocation3 [shape = 's32[2]{0}', space=sflag, size = 0x8, scoped, tag = 'scoped memory for tpu_custom_call.1']
    #allocation4 [shape = 's32[2]{0}', space=sflag, size = 0x8, scoped, tag = 'scoped memory for tpu_custom_call.1']
    #allocation5 [shape = 'u8[4096]{0}', space=vmem, size = 0x1000, scoped, tag = 'input window, operand 1, single buffered']
    #allocation6 [shape = 's32[1]{0}', space=sflag, size = 0x4, scoped, tag = 'scoped memory for tpu_custom_call.1']
    #allocation7 [shape = 'u8[16384]{0}', space=vmem, size = 0x4000, scoped, tag = 'output window, operand 0']
    %7 = vsyncpa [#allocation3], 0
    %s8 = scalar_lea.sflag [#allocation3], 1
    %9 = vsyncpa %s8, 0
    %10 = vsyncpa [#allocation6], 0
    %11 = vsyncpa [#allocation4], 0
    %s12 = scalar_lea.sflag [#allocation4], 1
    %13 = vsyncpa %s12, 0
    loop: start=0, step=1, limit=4
    $region2: #{tpu_custom_call.1} parent=1 // loop_pre_header
      _
    $region3: #{tpu_custom_call.1} parent=1 // loop_header
      %s15 = sphi 0, %s19
      %p16 = scmp.ge.s32.totalorder %s15, 4
      %s25 = sphi 0, %s27
      %s28 = sphi 0, %s25
      %s29 = sphi 0, %s28
      %s45 = sphi 0, %s29
      %s49 = sphi 0, %s49
      %s51 = sphi 0, %s49
      %s52 = sphi 0, %s51
      %s66 = sphi 0, %s52
      %s72 = sphi 0, %s74
      %s75 = sphi 0, %s72
      %s76 = sphi 0, %s75
      %s92 = sphi 0, %s76
    $region4: #{tpu_custom_call.1} parent=1 // loop_header_branch
      %18 = sbr.rel (%p16) target = $region8
    $region5: #{tpu_custom_call.1} parent=1 // loop_body
      %s20 = ssub.s32 %s15, 1
      %s21 = ssub.s32 %s15, 2
      %s22 = sadd.s32 %s15, 1
      %s23 = ssub.s32 %s15, %s22
      %p24 = scmp.eq.s32.totalorder %s23, 0
      %s26 = sadd.s32 %s25, 1
      %s27 = scalar_select %p24, %s25, %s26
      %p30 = pneg %p24
      %p31 = scmp.eq.s32.totalorder %s15, 1
      %p32 = por %p30, %p31
      %p33 = scmp.ne.s32.totalorder %s25, %s28
      %p34 = scmp.eq.s32.totalorder %s15, 0
      %p35 = por %p33, %p34
      %p36 = scmp.ne.s32.totalorder %s25, %s28
      %p37 = scmp.eq.s32.totalorder %s20, 1
      %p38 = por %p36, %p37
      %p39 = scmp.ne.s32.totalorder %s28, %s29
      %p40 = scmp.eq.s32.totalorder %s20, 0
      %p41 = por %p39, %p40
      %p42 = scmp.ne.s32.totalorder %s28, %s29
      %p43 = scmp.eq.s32.totalorder %s21, 1
      %p44 = por %p42, %p43
      %p46 = scmp.ne.s32.totalorder %s29, %s45
      %p47 = scmp.eq.s32.totalorder %s21, 0
      %p48 = por %p46, %p47
      %s50 = sadd.s32 %s49, 1
      %p53 = scmp.eq.s32.totalorder %s15, 1
      %p54 = scmp.ne.s32.totalorder %s49, %s51
      %p55 = scmp.eq.s32.totalorder %s15, 0
      %p56 = por %p54, %p55
      %p57 = scmp.ne.s32.totalorder %s49, %s51
      %p58 = scmp.eq.s32.totalorder %s20, 1
      %p59 = por %p57, %p58
      %p60 = scmp.ne.s32.totalorder %s51, %s52
      %p61 = scmp.eq.s32.totalorder %s20, 0
      %p62 = por %p60, %p61
      %p63 = scmp.ne.s32.totalorder %s51, %s52
      %p64 = scmp.eq.s32.totalorder %s21, 1
      %p65 = por %p63, %p64
      %p67 = scmp.ne.s32.totalorder %s52, %s66
      %p68 = scmp.eq.s32.totalorder %s21, 0
      %p69 = por %p67, %p68
      %s70 = ssub.s32 %s15, %s22
      %p71 = scmp.eq.s32.totalorder %s70, 0
      %s73 = sadd.s32 %s72, 1
      %s74 = scalar_select %p71, %s72, %s73
      %p77 = pneg %p71
      %p78 = scmp.eq.s32.totalorder %s15, 1
      %p79 = por %p77, %p78
      %p80 = scmp.ne.s32.totalorder %s72, %s75
      %p81 = scmp.eq.s32.totalorder %s15, 0
      %p82 = por %p80, %p81
      %p83 = scmp.ne.s32.totalorder %s72, %s75
      %p84 = scmp.eq.s32.totalorder %s20, 1
      %p85 = por %p83, %p84
      %p86 = scmp.ne.s32.totalorder %s75, %s76
      %p87 = scmp.eq.s32.totalorder %s20, 0
      %p88 = por %p86, %p87
      %p89 = scmp.ne.s32.totalorder %s75, %s76
      %p90 = scmp.eq.s32.totalorder %s21, 1
      %p91 = por %p89, %p90
      %p93 = scmp.ne.s32.totalorder %s76, %s92
      %p94 = scmp.eq.s32.totalorder %s21, 0
      %p95 = por %p93, %p94
      %p96 = scmp.le.s32.totalorder 1, %s15
      %p97 = scmp.lt.s32.totalorder %s15, 3
      %p98 = pnand %p96, %p97
      %p99 = pneg %p98
      // Predicated region
      $region9: #{tpu_custom_call.1} parent=5 // pred_check
        _
      $region10: #{tpu_custom_call.1} parent=5 // pred_check_branch
        %101 = sbr.rel (%p98) target = $region12
      $region11: #{tpu_custom_call.1} parent=5 // pred_region
        %s102 = ssub.s32 %s15, 1
        // Predicated region
        $region13: #{tpu_custom_call.1} parent=11 // pred_check
          %p103 = pneg %p62
        $region14: #{tpu_custom_call.1} parent=11 // pred_check_branch
          %105 = sbr.rel (%p103) target = $region16
        $region15: #{tpu_custom_call.1} parent=11 // pred_region
          %s107 = ssub.s32 128, 128
          %108 = vsyncadd [#allocation6], %s107
          %s110 = sshll.u32 [#allocation5], 4
          %s111 = int_to_ptr.vmem [resolvable:$true] %s110
          %113 = dma.hbm_to_vmem [thread:$0]  %s1, 128, %s111, [#allocation6]
        $region16: #{tpu_custom_call.1} parent=11 // pred_fallthru
          _
      $region12: #{tpu_custom_call.1} parent=5 // pred_fallthru
        _
      %p114 = scmp.lt.s32.totalorder %s15, 2
      // Predicated region
      $region17: #{tpu_custom_call.1} parent=5 // pred_check
        %p115 = pneg %p114
      $region18: #{tpu_custom_call.1} parent=5 // pred_check_branch
        %117 = sbr.rel (%p115) target = $region20
      $region19: #{tpu_custom_call.1} parent=5 // pred_region
        // Predicated region
        $region21: #{tpu_custom_call.1} parent=19 // pred_check
          %p118 = pneg %p35
        $region22: #{tpu_custom_call.1} parent=19 // pred_check_branch
          %120 = sbr.rel (%p118) target = $region24
        $region23: #{tpu_custom_call.1} parent=19 // pred_region
          %s121 = sand.u32 %s25, 1
          %s122 = scalar_lea.sflag [#allocation3], %s121
          %s123 = sand.u32 %s25, 1
          %s124 = smul.addr %s123, 16
          %s125 = scalar_lea.vmem [#allocation2], %s124
          %s127 = ssub.s32 256, 256
          %128 = vsyncadd %s122, %s127
          %s129 = smul.addr %s15, 2
          %s130 = smul.addr %s129, 128
          %s131 = scalar_lea.hbm %s0, %s130
          %s133 = sshll.u32 %s125, 4
          %s134 = int_to_ptr.vmem [resolvable:$true] %s133
          %136 = dma.hbm_to_vmem [thread:$0]  %s131, 256, %s134, %s122
        $region24: #{tpu_custom_call.1} parent=19 // pred_fallthru
          _
      $region20: #{tpu_custom_call.1} parent=5 // pred_fallthru
        _
      %p137 = scmp.le.s32.totalorder 1, %s15
      %p138 = scmp.lt.s32.totalorder %s15, 3
      %p139 = pnand %p137, %p138
      %p140 = pneg %p139
      // Predicated region
      $region25: #{tpu_custom_call.1} parent=5 // pred_check
        _
      $region26: #{tpu_custom_call.1} parent=5 // pred_check_branch
        %142 = sbr.rel (%p139) target = $region28
      $region27: #{tpu_custom_call.1} parent=5 // pred_region
        %s143 = ssub.s32 %s15, 1
        %s144 = sand.u32 %s28, 1
        %s145 = scalar_lea.sflag [#allocation3], %s144
        %s146 = sand.u32 %s28, 1
        %s147 = smul.addr %s146, 16
        %s148 = scalar_lea.vmem [#allocation2], %s147
        // Predicated region
        $region29: #{tpu_custom_call.1} parent=27 // pred_check
          %p149 = pneg %p41
        $region30: #{tpu_custom_call.1} parent=27 // pred_check_branch
          %151 = sbr.rel (%p149) target = $region32
        $region31: #{tpu_custom_call.1} parent=27 // pred_region
          %152 = dma.done %s145, 256
        $region32: #{tpu_custom_call.1} parent=27 // pred_fallthru
          _
        // Predicated region
        $region33: #{tpu_custom_call.1} parent=27 // pred_check
          %p153 = pneg %p62
        $region34: #{tpu_custom_call.1} parent=27 // pred_check_branch
          %155 = sbr.rel (%p153) target = $region36
        $region35: #{tpu_custom_call.1} parent=27 // pred_region
          %156 = dma.done [#allocation6], 128
        $region36: #{tpu_custom_call.1} parent=27 // pred_fallthru
          _
        %s157 = sand.u32 %s28, 1
        %s158 = scalar_lea.sflag [#allocation3], %s157
        %s159 = sand.u32 %s28, 1
        %s160 = smul.addr %s159, 16
        %s161 = scalar_lea.vmem [#allocation2], %s160
        %p162 = pneg %p41
        %p163 = pneg %p38
        %p164 = pneg %p62
        %p165 = pneg %p59
        %p166 = pneg %p88
        %p167 = pneg %p85
        %s168 = sand.u32 %s75, 1
        %s169 = scalar_lea.sflag [#allocation4], %s168
        %s170 = sand.u32 %s75, 1
        %s171 = smul.addr %s170, 16
        %s172 = scalar_lea.vmem [#allocation7], %s171
        %v173 = vld [vmem:[%s148] sm:$0xff]
        %v174 = vld [vmem:[%s148 + $0x8] sm:$0xff]
        %v175 = vld [vmem:[#allocation5] ss:$4 sm:$0x3]
        %s176 = scalar_lea.vmem [#allocation5], 3
        %v177 = vld [vmem:[%s176] ss:$4 sm:$0x3]
        %v179 = vlaneseq
        %v180 = vshrl.u32 %v179, 7
        %v181 = vsub.s32 0, %v180
        %v182 = vrot.slane %v177, %v181
        %v183 = vlaneseq
        %v184 = vshrl.u32 %v183, 7
        %v185 = vsub.s32 1, %v184
        %v186 = vrot.slane %v177, %v185
        %v189 = vmul.f32 %v173, %v182
        %v190 = vmul.f32 %v174, %v186
        %vm191 = vcmask 130048
        %v192 = vsel %vm191, %v190, 0.0
        %v193 = vadd.f32 %v189, %v192
        %194 = vadd.xlane.f32.xlu0 %v193
        %v195 = vpop.xlane.xlu0 %194
        %v196 = vmul.f32 %v195, 0.0625
        %v197 = vmul.f32 %v196, %v182
        %v198 = vmul.f32 %v196, %v186
        %v199 = vsub.f32 %v173, %v197
        %v200 = vsub.f32 %v174, %v198
        %v201 = vmul.f32 %v199, %v199
        %v202 = vmul.f32 %v200, %v200
        %v204 = vlaneseq
        %v205 = vshrl.u32 %v204, 7
        %v206 = vsub.s32 0, %v205
        %v207 = vrot.slane %v175, %v206
        %v208 = vlaneseq
        %v209 = vshrl.u32 %v208, 7
        %v210 = vsub.s32 1, %v209
        %v211 = vrot.slane %v175, %v210
        %v214 = vmul.f32 %v201, %v207
        %v215 = vmul.f32 %v202, %v211
        %v216 = vsel %vm191, %v215, 0.0
        %v217 = vadd.f32 %v214, %v216
        %218 = vadd.xlane.f32.xlu0 %v217
        %v219 = vpop.xlane.xlu0 %218
        %v220 = vadd.f32 %v219, 1e-12
        %v221 = vrsqrt.pop %v220
        %v222 = vmul.f32 %v199, %v221
        %v223 = vmul.f32 %v200, %v221
        %s224 = scalar_lea.vmem [#allocation5], 1
        %v225 = vld [vmem:[%s224] ss:$4 sm:$0x3]
        %v227 = vlaneseq
        %v228 = vshrl.u32 %v227, 7
        %v229 = vsub.s32 0, %v228
        %v230 = vrot.slane %v225, %v229
        %v231 = vlaneseq
        %v232 = vshrl.u32 %v231, 7
        %v233 = vsub.s32 1, %v232
        %v234 = vrot.slane %v225, %v233
        %v237 = vmul.f32 %v222, %v230
        %v238 = vmul.f32 %v223, %v234
        %s239 = scalar_lea.vmem [#allocation5], 2
        %v240 = vld [vmem:[%s239] ss:$4 sm:$0x3]
        %v242 = vlaneseq
        %v243 = vshrl.u32 %v242, 7
        %v244 = vsub.s32 0, %v243
        %v245 = vrot.slane %v240, %v244
        %v246 = vlaneseq
        %v247 = vshrl.u32 %v246, 7
        %v248 = vsub.s32 1, %v247
        %v249 = vrot.slane %v240, %v248
        %v252 = vadd.f32 %v237, %v245
        %v253 = vadd.f32 %v238, %v249
        %254 = vst [vmem:[%s172] sm:$0xff] %v252
        %255 = vst.msk [vmem:[%s172 + $0x8] sm:$0xff] %vm191, %v253
        %s256 = sand.u32 %s75, 1
        %s257 = scalar_lea.sflag [#allocation4], %s256
        %s258 = sand.u32 %s75, 1
        %s259 = smul.addr %s258, 16
        %s260 = scalar_lea.vmem [#allocation7], %s259
        // Predicated region
        $region37: #{tpu_custom_call.1} parent=27 // pred_check
          %p261 = pneg %p85
        $region38: #{tpu_custom_call.1} parent=27 // pred_check_branch
          %263 = sbr.rel (%p261) target = $region40
        $region39: #{tpu_custom_call.1} parent=27 // pred_region
          %s265 = ssub.s32 256, 256
          %266 = vsyncadd %s257, %s265
          %s267 = smul.addr %s20, 2
          %s268 = smul.addr %s267, 128
          %s269 = scalar_lea.hbm %s2, %s268
          %s271 = sshll.u32 %s260, 4
          %s272 = int_to_ptr.vmem [resolvable:$true] %s271
          %274 = dma.vmem_to_hbm [thread:$0]  %s272, 256, %s269, %s257
        $region40: #{tpu_custom_call.1} parent=27 // pred_fallthru
          _
      $region28: #{tpu_custom_call.1} parent=5 // pred_fallthru
        _
      %p275 = scmp.le.s32.totalorder 2, %s15
      // Predicated region
      $region41: #{tpu_custom_call.1} parent=5 // pred_check
        %p276 = pneg %p275
      $region42: #{tpu_custom_call.1} parent=5 // pred_check_branch
        %278 = sbr.rel (%p276) target = $region44
      $region43: #{tpu_custom_call.1} parent=5 // pred_region
        %s279 = ssub.s32 %s15, 2
        // Predicated region
        $region45: #{tpu_custom_call.1} parent=43 // pred_check
          %p280 = pneg %p91
        $region46: #{tpu_custom_call.1} parent=43 // pred_check_branch
          %282 = sbr.rel (%p280) target = $region48
        $region47: #{tpu_custom_call.1} parent=43 // pred_region
          %s283 = sand.u32 %s76, 1
          %s284 = scalar_lea.sflag [#allocation4], %s283
          %s285 = sand.u32 %s76, 1
          %s286 = smul.addr %s285, 16
          %s287 = scalar_lea.vmem [#allocation7], %s286
          %288 = dma.done %s284, 256
        $region48: #{tpu_custom_call.1} parent=43 // pred_fallthru
          _
      $region44: #{tpu_custom_call.1} parent=5 // pred_fallthru
        _
    $region6: #{tpu_custom_call.1} parent=1 // loop_footer
      %s19 = sadd.s32 1, %s15
    $region7: #{tpu_custom_call.1} parent=1 // loop_footer_branch
      %14 = sbr.rel target = $region3
    $region8: #{tpu_custom_call.1} parent=1 // loop_exit
      _
    %289 = vsyncpa [#allocation3], 1
    %s290 = scalar_lea.sflag [#allocation3], 1
    %291 = vsyncpa %s290, 1
    %292 = vsyncpa [#allocation6], 1
    %293 = vsyncpa [#allocation4], 1
    %s294 = scalar_lea.sflag [#allocation4], 1
    %295 = vsyncpa %s294, 1

</llo_original>
